<compile_context>
chip_gen: v7x
topology: tpu7x:2x2x1
jax: 0.10.0
libtpu: 0.0.40
codegen_flags: <defaults>
</compile_context>

<pallas_src>
import jax
import jax.numpy as jnp
from jax.experimental import pallas as pl
from jax.experimental.pallas import tpu as pltpu


_EPS = 1e-6  # PyTorch GaussianNLLLoss default


def _round_up(x: int, m: int) -> int:
    return ((x + m - 1) // m) * m


def _device_kind() -> str:
    try:
        return jax.devices()[0].device_kind.lower()
    except Exception:  # pragma: no cover - defensive
        return ""


def _make_kernel(rows, tile_rows, lanes, num_inner, needs_mask):
    sub = tile_rows // 8

    def kernel(mean_ref, var_ref, tgt_ref, out_ref):
        i = pl.program_id(1)

        @pl.when(i == 0)
        def _init():
            out_ref[...] = jnp.zeros_like(out_ref)

        mean = mean_ref[...].astype(jnp.float32)
        var = var_ref[...].astype(jnp.float32)
        tgt = tgt_ref[...].astype(jnp.float32)

        if needs_mask:
            # Ragged tail: rows beyond the logical extent get neutral values
            # (mean=0, var=1, tgt=0) so their loss contribution is exactly 0.
            c = pl.program_id(0)
            start = (c * num_inner + i) * tile_rows
            n_valid = rows - start  # may be <= 0 for clamped (duplicate) blocks
            row_ids = jax.lax.broadcasted_iota(jnp.int32, (tile_rows, lanes), 0)
            valid = row_ids < n_valid
            mean = jnp.where(valid, mean, 0.0)
            tgt = jnp.where(valid, tgt, 0.0)
            var = jnp.where(valid, var, 1.0)

        var = jnp.maximum(var, jnp.float32(_EPS))
        diff = mean - tgt
        inv_var = pl.reciprocal(var, approx=False)  # EUP; f32-accurate
        loss = 0.5 * (jnp.log(var) + diff * diff * inv_var)

        # Pure-VALU accumulation into the resident (1, 8, lanes) block; the
        # cross-sublane 8->1 reduce is deferred to the wrapper finalize.
        out_ref[...] += jnp.sum(loss.reshape(sub, 8, lanes), axis=0)[None]

    return kernel


def gaussian_nll_loss_wrapper(inputs, target, mask=None, *, lanes=None,
                              max_tile_rows=None, num_outer=None):
    """Equivalent of GaussianNLLLossWrapper(nn.GaussianNLLLoss()).forward(input, target).

    Args:
      inputs: (B, S, 2) — [..., 0] = predicted mean, [..., 1] = predicted variance.
      target: (B, S) — ground-truth values (any float dtype; cast in-kernel).
      mask:   unused (the reference PyTorch forward ignores it too).

    Returns:
      Scalar float32 loss (reduction='mean', full=False, eps=1e-6).
    """
    del mask  # ignored, as in the reference module
    if inputs.ndim != 3 or inputs.shape[-1] != 2:
        raise ValueError(f"inputs must be (B, S, 2), got {inputs.shape}")
    if target.shape != inputs.shape[:2]:
        raise ValueError(f"target must be {inputs.shape[:2]}, got {target.shape}")

    b, s = target.shape
    n = b * s

    kind = _device_kind()
    is_v7 = "v7" in kind
    if num_outer is None:
        num_outer = 2 if is_v7 else 1          # 2 TensorCores only on v7x
    if max_tile_rows is None:
        max_tile_rows = 2048 if is_v7 else 1024
    vmem_limit = (48 if is_v7 else 32) * 1024 * 1024

    # Channel split (see TODO at top) — one slice pass per channel, native dtype.
    mean = inputs[..., 0]
    var = inputs[..., 1]
    tgt = target

    # Lane width: prefer a divisor of n so all reshapes below are zero-copy.
    if lanes is None:
        lanes = None
        for cand in (512, 256, 128):
            if n % cand == 0 and n // cand >= 8:
                lanes = cand
                break
        if lanes is None:
            for cand in (512, 256, 128):
                if n % cand == 0:
                    lanes = cand
                    break
        if lanes is None:
            lanes = 128  # ragged fallback below

    # Sublane multiple of the narrowest stream dtype (f32->8, bf16->16, int8->32).
    min_itemsize = min(a.dtype.itemsize for a in (mean, var, tgt))
    sub_mult = max(32 // int(min_itemsize), 8)

    if n % lanes == 0:
        rows = n // lanes
        mean2 = mean.reshape(rows, lanes)
        var2 = var.reshape(rows, lanes)
        tgt2 = tgt.reshape(rows, lanes)
    else:
        # TODO(synk): rare fallback (N not a multiple of 128): pad flat streams with
        # neutral values; costs one extra HBM pass per stream.
        rows = -(-n // lanes)
        pad = rows * lanes - n
        mean2 = jnp.pad(mean.reshape(-1), (0, pad), constant_values=0).reshape(rows, lanes)
        var2 = jnp.pad(var.reshape(-1), (0, pad), constant_values=1).reshape(rows, lanes)
        tgt2 = jnp.pad(tgt.reshape(-1), (0, pad), constant_values=0).reshape(rows, lanes)

    # --- static grid geometry (no padded_rows requirement) -------------------
    tile_rows = _round_up(min(max_tile_rows, _round_up(rows, sub_mult)), sub_mult)
    n_blocks = -(-rows // tile_rows)
    num_outer = max(1, min(num_outer, n_blocks))
    num_inner = -(-n_blocks // num_outer)
    needs_mask = (num_outer * num_inner * tile_rows != rows)

    def in_index_map(c, i, _ni=num_inner, _nb=n_blocks):
        # Clamp so a duplicate trailing block (odd split) never walks past the array;
        # its contribution is zeroed by the in-kernel mask.
        return (jnp.minimum(c * _ni + i, _nb - 1), 0)

    in_block = pl.BlockSpec((tile_rows, lanes), in_index_map)
    out_block = pl.BlockSpec((1, 8, lanes), lambda c, i: (c, 0, 0))

    bytes_accessed = (
        mean2.size * mean2.dtype.itemsize
        + var2.size * var2.dtype.itemsize
        + tgt2.size * tgt2.dtype.itemsize
        + num_outer * 8 * lanes * 4
    )
    cost = pl.CostEstimate(
        flops=8 * n,            # sub, muls, adds, max, scale, accum
        transcendentals=2 * n,  # log + reciprocal
        bytes_accessed=bytes_accessed,
    )

    kernel = _make_kernel(rows, tile_rows, lanes, num_inner, needs_mask)

    partials = pl.pallas_call(
        kernel,
        out_shape=jax.ShapeDtypeStruct((num_outer, 8, lanes), jnp.float32),
        grid_spec=pltpu.PrefetchScalarGridSpec(
            num_scalar_prefetch=0,
            grid=(num_outer, num_inner),
            in_specs=[in_block, in_block, in_block],
            out_specs=out_block,
        ),
        compiler_params=pltpu.CompilerParams(
            dimension_semantics=("parallel", "arbitrary"),
            vmem_limit_bytes=vmem_limit,
        ),
        cost_estimate=cost,
    )(mean2, var2, tgt2)

    # Finalize: 8->1 sublane + lane reduce and a single divide by the true count N.
    return jnp.sum(partials) / jnp.float32(n)


def _reference(inputs, target):
    mean = inputs[..., 0].astype(jnp.float32)
    var = jnp.maximum(inputs[..., 1].astype(jnp.float32), _EPS)
    tgt = target.astype(jnp.float32)
    return jnp.mean(0.5 * (jnp.log(var) + (mean - tgt) ** 2 / var))


if __name__ == "__main__":
    # Case 1: small shapes consistent with the module's (B, S, 2) / (B, S) contract.
    B, S = 4, 256
    k1, k2, k3 = jax.random.split(jax.random.PRNGKey(0), 3)
    means = jax.random.normal(k1, (B, S), dtype=jnp.float32)
    variances = jax.nn.softplus(jax.random.normal(k2, (B, S), dtype=jnp.float32)) + 0.1
    inputs = jnp.stack([means, variances], axis=-1)            # (B, S, 2)
    target = jax.random.normal(k3, (B, S), dtype=jnp.float32)  # (B, S)

    loss = jax.block_until_ready(gaussian_nll_loss_wrapper(inputs, target))
    ref = _reference(inputs, target)
    assert jnp.allclose(loss, ref, rtol=1e-4, atol=1e-6), (loss, ref)

    # Case 2: forces multi-step accumulation along the inner 'arbitrary' axis.
    B2, S2 = 8, 2048
    k4, k5, k6 = jax.random.split(jax.random.PRNGKey(1), 3)
    means2 = jax.random.normal(k4, (B2, S2), dtype=jnp.float32)
    variances2 = jax.nn.softplus(jax.random.normal(k5, (B2, S2), dtype=jnp.float32)) + 0.05
    inputs2 = jnp.stack([means2, variances2], axis=-1)
    target2 = jax.random.normal(k6, (B2, S2), dtype=jnp.float32)

    loss2 = jax.block_until_ready(
        gaussian_nll_loss_wrapper(inputs2, target2, max_tile_rows=8))
    ref2 = _reference(inputs2, target2)
    assert jnp.allclose(loss2, ref2, rtol=1e-4, atol=1e-6), (loss2, ref2)

    # Case 3: ragged row count (in-kernel tail mask) + bf16 target (sub_mult=16).
    B3, S3 = 5, 384
    k7, k8, k9 = jax.random.split(jax.random.PRNGKey(2), 3)
    means3 = jax.random.normal(k7, (B3, S3), dtype=jnp.float32)
    variances3 = jax.nn.softplus(jax.random.normal(k8, (B3, S3), dtype=jnp.float32)) + 0.2
    inputs3 = jnp.stack([means3, variances3], axis=-1)
    target3 = jax.random.normal(k9, (B3, S3), dtype=jnp.float32).astype(jnp.bfloat16)

    loss3 = jax.block_until_ready(gaussian_nll_loss_wrapper(inputs3, target3))
    ref3 = _reference(inputs3, target3)
    assert jnp.allclose(loss3, ref3, rtol=1e-4, atol=1e-6), (loss3, ref3)

    print("KERNEL_OK")
</pallas_src>

<mosaic_0001>
module attributes {stable_mosaic.version = 11 : i64} {
  func.func @kernel(%arg0: i32, %arg1: i32, %arg2: memref<8x128xf32, #tpu.memory_space<vmem>>, %arg3: memref<8x128xf32, #tpu.memory_space<vmem>>, %arg4: memref<8x128xf32, #tpu.memory_space<vmem>>, %arg5: memref<1x8x128xf32, #tpu.memory_space<vmem>>) attributes {dimension_semantics = [#tpu.dimension_semantics<parallel>, #tpu.dimension_semantics<arbitrary>], iteration_bounds = array<i64: 1, 1>, scalar_prefetch = 0 : i64, scratch_operands = 0 : i64, tpu.core_type = #tpu.core_type<tc>, window_params = [{transform_indices = @transform_0, window_bounds = array<i64: 8, 128>}, {transform_indices = @transform_1, window_bounds = array<i64: 8, 128>}, {transform_indices = @transform_2, window_bounds = array<i64: 8, 128>}, {transform_indices = @transform_3, window_bounds = array<i64: 1, 8, 128>}]} {
    %c0_i32 = arith.constant 0 : i32
    %0 = arith.cmpi eq, %arg1, %c0_i32 : i32
    %1 = arith.extui %0 : i1 to i32
    %c0_i32_0 = arith.constant 0 : i32
    %2 = arith.cmpi ne, %1, %c0_i32_0 : i32
    scf.if %2 {
      %cst_14 = arith.constant 0.000000e+00 : f32
      %22 = vector.broadcast %cst_14 : f32 to vector<1x8x128xf32>
      %c0_15 = arith.constant 0 : index
      %c0_16 = arith.constant 0 : index
      %c0_17 = arith.constant 0 : index
      %23 = vector.load %arg5[%c0_15, %c0_16, %c0_17] : memref<1x8x128xf32, #tpu.memory_space<vmem>>, vector<1x8x128xf32>
      tpu.vector_store %arg5[%c0_15, %c0_16, %c0_17], %22 {strides = array<i32>} : memref<1x8x128xf32, #tpu.memory_space<vmem>>, vector<1x8x128xf32>,
    } else {
    }
    %c0 = arith.constant 0 : index
    %c0_1 = arith.constant 0 : index
    %3 = vector.load %arg2[%c0, %c0_1] : memref<8x128xf32, #tpu.memory_space<vmem>>, vector<8x128xf32>
    %c0_2 = arith.constant 0 : index
    %c0_3 = arith.constant 0 : index
    %4 = vector.load %arg3[%c0_2, %c0_3] : memref<8x128xf32, #tpu.memory_space<vmem>>, vector<8x128xf32>
    %c0_4 = arith.constant 0 : index
    %c0_5 = arith.constant 0 : index
    %5 = vector.load %arg4[%c0_4, %c0_5] : memref<8x128xf32, #tpu.memory_space<vmem>>, vector<8x128xf32>
    %cst = arith.constant 9.99999997E-7 : f32
    %6 = vector.broadcast %cst : f32 to vector<8x128xf32>
    %7 = arith.maximumf %4, %6 : vector<8x128xf32>
    %8 = arith.subf %3, %5 : vector<8x128xf32>
    %9 = tpu.reciprocal %7 : vector<8x128xf32> -> vector<8x128xf32>
    %10 = math.log %7 : vector<8x128xf32>
    %11 = arith.mulf %8, %8 : vector<8x128xf32>
    %12 = arith.mulf %11, %9 : vector<8x128xf32>
    %13 = arith.addf %10, %12 : vector<8x128xf32>
    %cst_6 = arith.constant 5.000000e-01 : f32
    %14 = vector.broadcast %cst_6 : f32 to vector<8x128xf32>
    %15 = arith.mulf %14, %13 : vector<8x128xf32>
    %c0_7 = arith.constant 0 : index
    %c0_8 = arith.constant 0 : index
    %c0_9 = arith.constant 0 : index
    %16 = vector.load %arg5[%c0_7, %c0_8, %c0_9] : memref<1x8x128xf32, #tpu.memory_space<vmem>>, vector<1x8x128xf32>
    %17 = vector.shape_cast %15 : vector<8x128xf32> to vector<1x8x128xf32>
    %cst_10 = arith.constant dense<0.000000e+00> : vector<8x128xf32>
    %18 = vector.multi_reduction <add>, %17, %cst_10 [0] : vector<1x8x128xf32> to vector<8x128xf32>
    %19 = vector.shape_cast %18 : vector<8x128xf32> to vector<1x8x128xf32>
    %20 = arith.addf %16, %19 : vector<1x8x128xf32>
    %c0_11 = arith.constant 0 : index
    %c0_12 = arith.constant 0 : index
    %c0_13 = arith.constant 0 : index
    %21 = vector.load %arg5[%c0_11, %c0_12, %c0_13] : memref<1x8x128xf32, #tpu.memory_space<vmem>>, vector<1x8x128xf32>
    tpu.vector_store %arg5[%c0_11, %c0_12, %c0_13], %20 {strides = array<i32>} : memref<1x8x128xf32, #tpu.memory_space<vmem>>, vector<1x8x128xf32>,
    return
  }
  func.func @transform_0(%arg0: i32, %arg1: i32) -> (i32, i32) {
    %c1_i32 = arith.constant 1 : i32
    %0 = arith.muli %arg0, %c1_i32 : i32
    %1 = arith.addi %0, %arg1 : i32
    %c0_i32 = arith.constant 0 : i32
    %2 = arith.minsi %1, %c0_i32 : i32
    %c0_i32_0 = arith.constant 0 : i32
    %c0_i32_1 = arith.constant 0 : i32
    return %2, %c0_i32_0 : i32, i32
  }
  func.func @transform_1(%arg0: i32, %arg1: i32) -> (i32, i32) {
    %c1_i32 = arith.constant 1 : i32
    %0 = arith.muli %arg0, %c1_i32 : i32
    %1 = arith.addi %0, %arg1 : i32
    %c0_i32 = arith.constant 0 : i32
    %2 = arith.minsi %1, %c0_i32 : i32
    %c0_i32_0 = arith.constant 0 : i32
    %c0_i32_1 = arith.constant 0 : i32
    return %2, %c0_i32_0 : i32, i32
  }
  func.func @transform_2(%arg0: i32, %arg1: i32) -> (i32, i32) {
    %c1_i32 = arith.constant 1 : i32
    %0 = arith.muli %arg0, %c1_i32 : i32
    %1 = arith.addi %0, %arg1 : i32
    %c0_i32 = arith.constant 0 : i32
    %2 = arith.minsi %1, %c0_i32 : i32
    %c0_i32_0 = arith.constant 0 : i32
    %c0_i32_1 = arith.constant 0 : i32
    return %2, %c0_i32_0 : i32, i32
  }
  func.func @transform_3(%arg0: i32, %arg1: i32) -> (i32, i32, i32) {
    %c0_i32 = arith.constant 0 : i32
    %c0_i32_0 = arith.constant 0 : i32
    %c0_i32_1 = arith.constant 0 : i32
    return %arg0, %c0_i32, %c0_i32_0 : i32, i32, i32
  }
}

</mosaic_0001>

<llo_original>
// kernel: tpu_custom_call.1
$region0: #{tpu_custom_call.1}
  #allocation0 [shape = 'u32[]', space=smem, size = 0x4, offset = 0x4, fixed_abs, tag = 'smem constant byte address 0x4 - core index']
  #allocation1 [shape = 'u32[144,128]{1,0:T(1,128)}', space=vmem, size = 0x12000, scoped, tag = 'internal scratch']
  %s0 = inlined_call_operand.hbm [shape: f32[8,128], index: 0, kind: input, shape index: {}]
  %s1 = inlined_call_operand.hbm [shape: f32[8,128], index: 1, kind: input, shape index: {}]
  %s2 = inlined_call_operand.hbm [shape: f32[8,128], index: 2, kind: input, shape index: {}]
  %s3 = inlined_call_operand.hbm [shape: f32[1,8,128], index: 3, kind: output, shape index: {}]
  %s4 = sld [smem:[#allocation0]]
  $region38: #{tpu_custom_call.1} parent=0
    _
  %s6 = ssub.s32 1, %s4
  %s7 = scalar_select 0, %s6, %s4
  $region1: #{tpu_custom_call.1} parent=0
    #allocation2 [shape = 'u8[4096]{0}', space=vmem, size = 0x1000, scoped, tag = 'input window, operand 0, single buffered']
    #allocation3 [shape = 's32[1]{0}', space=sflag, size = 0x4, scoped, tag = 'scoped memory for tpu_custom_call.1']
    #allocation4 [shape = 's32[1]{0}', space=sflag, size = 0x4, scoped, tag = 'scoped memory for tpu_custom_call.1']
    #allocation5 [shape = 'u8[4096]{0}', space=vmem, size = 0x1000, scoped, tag = 'input window, operand 1, single buffered']
    #allocation6 [shape = 's32[1]{0}', space=sflag, size = 0x4, scoped, tag = 'scoped memory for tpu_custom_call.1']
    #allocation7 [shape = 'u8[4096]{0}', space=vmem, size = 0x1000, scoped, tag = 'input window, operand 2, single buffered']
    #allocation8 [shape = 'u8[4096]{0}', space=vmem, size = 0x1000, scoped, tag = 'output window, operand 0, single buffered']
    %8 = vsyncpa [#allocation3], 0
    %9 = vsyncpa [#allocation6], 0
    %10 = vsyncpa [#allocation4], 0
    // Predicated region
    $region2: #{tpu_custom_call.1} parent=1 // pred_check
      _
    $region3: #{tpu_custom_call.1} parent=1 // pred_check_branch
      %12 = sbr.rel (0) target = $region5
    $region4: #{tpu_custom_call.1} parent=1 // pred_region
      %s13 = sadd.s32 0, 0
      %p14 = scmp.lt.s32.totalorder %s13, 0
      %s15 = scalar_select %p14, %s13, 0
      %s17 = ssub.s32 128, 128
      %18 = vsyncadd [#allocation3], %s17
      %s19 = smul.addr %s15, 128
      %s20 = scalar_lea.hbm %s0, %s19
      %s22 = sshll.u32 [#allocation2], 4
      %s23 = int_to_ptr.vmem [resolvable:$true] %s22
      %25 = dma.hbm_to_vmem [thread:$0]  %s20, 128, %s23, [#allocation3]
    $region5: #{tpu_custom_call.1} parent=1 // pred_fallthru
      _
    // Predicated region
    $region6: #{tpu_custom_call.1} parent=1 // pred_check
      _
    $region7: #{tpu_custom_call.1} parent=1 // pred_check_branch
      %27 = sbr.rel (0) target = $region9
    $region8: #{tpu_custom_call.1} parent=1 // pred_region
      %s28 = sadd.s32 0, 0
      %p29 = scmp.lt.s32.totalorder %s28, 0
      %s30 = scalar_select %p29, %s28, 0
      %s32 = ssub.s32 128, 128
      %33 = vsyncadd [#allocation6], %s32
      %s34 = smul.addr %s30, 128
      %s35 = scalar_lea.hbm %s1, %s34
      %s37 = sshll.u32 [#allocation5], 4
      %s38 = int_to_ptr.vmem [resolvable:$true] %s37
      %40 = dma.hbm_to_vmem [thread:$0]  %s35, 128, %s38, [#allocation6]
    $region9: #{tpu_custom_call.1} parent=1 // pred_fallthru
      _
    // Predicated region
    $region10: #{tpu_custom_call.1} parent=1 // pred_check
      _
    $region11: #{tpu_custom_call.1} parent=1 // pred_check_branch
      %42 = sbr.rel (0) target = $region13
    $region12: #{tpu_custom_call.1} parent=1 // pred_region
      %s43 = sadd.s32 0, 0
      %p44 = scmp.lt.s32.totalorder %s43, 0
      %s45 = scalar_select %p44, %s43, 0
      %s47 = ssub.s32 128, 128
      %48 = vsyncadd [#allocation6], %s47
      %s49 = smul.addr %s45, 128
      %s50 = scalar_lea.hbm %s2, %s49
      %s52 = sshll.u32 [#allocation7], 4
      %s53 = int_to_ptr.vmem [resolvable:$true] %s52
      %55 = dma.hbm_to_vmem [thread:$0]  %s50, 128, %s53, [#allocation6]
    $region13: #{tpu_custom_call.1} parent=1 // pred_fallthru
      _
    // Predicated region
    $region14: #{tpu_custom_call.1} parent=1 // pred_check
      _
    $region15: #{tpu_custom_call.1} parent=1 // pred_check_branch
      %57 = sbr.rel (0) target = $region17
    $region16: #{tpu_custom_call.1} parent=1 // pred_region
      %58 = dma.done [#allocation3], 128
    $region17: #{tpu_custom_call.1} parent=1 // pred_fallthru
      _
    // Predicated region
    $region18: #{tpu_custom_call.1} parent=1 // pred_check
      _
    $region19: #{tpu_custom_call.1} parent=1 // pred_check_branch
      %60 = sbr.rel (0) target = $region21
    $region20: #{tpu_custom_call.1} parent=1 // pred_region
      %61 = dma.done [#allocation6], 128
    $region21: #{tpu_custom_call.1} parent=1 // pred_fallthru
      _
    // Predicated region
    $region22: #{tpu_custom_call.1} parent=1 // pred_check
      _
    $region23: #{tpu_custom_call.1} parent=1 // pred_check_branch
      %63 = sbr.rel (0) target = $region25
    $region24: #{tpu_custom_call.1} parent=1 // pred_region
      %64 = dma.done [#allocation6], 128
    $region25: #{tpu_custom_call.1} parent=1 // pred_fallthru
      _
    %s65 = sadd.s32 0, 0
    %p66 = scmp.lt.s32.totalorder %s65, 0
    %s67 = scalar_select %p66, %s65, 0
    %s68 = sadd.s32 0, 0
    %p69 = scmp.lt.s32.totalorder %s68, 0
    %s70 = scalar_select %p69, %s68, 0
    %s71 = sadd.s32 0, 0
    %p72 = scmp.lt.s32.totalorder %s71, 0
    %s73 = scalar_select %p72, %s71, 0
    %p74 = scmp.eq.s32.totalorder 0, 0
    // Predicated region
    $region26: #{tpu_custom_call.1} parent=1 // pred_check
      %p75 = pneg %p74
    $region27: #{tpu_custom_call.1} parent=1 // pred_check_branch
      %77 = sbr.rel (%p75) target = $region29
    $region28: #{tpu_custom_call.1} parent=1 // pred_region
      %78 = vst [vmem:[#allocation8] sm:$0xff] 0.0
    $region29: #{tpu_custom_call.1} parent=1 // pred_fallthru
      _
    %v79 = vld [vmem:[#allocation2] sm:$0xff]
    %v80 = vld [vmem:[#allocation5] sm:$0xff]
    %v81 = vld [vmem:[#allocation7] sm:$0xff]
    %v82 = vmax.f32 %v80, 1e-06
    %v83 = vsub.f32 %v79, %v81
    %v84 = vrcp.pop %v82
    %v85 = vlog2.pop %v82
    %v86 = vmul.f32 %v85, 0.6931472
    %v87 = vmul.f32 %v83, %v83
    %v88 = vmul.f32 %v87, %v84
    %v89 = vadd.f32 %v86, %v88
    %v90 = vmul.f32 %v89, 0.5
    %v91 = vld [vmem:[#allocation8] sm:$0xff]
    %v92 = vadd.f32 %v90, 0.0
    %v93 = vadd.f32 %v91, %v92
    %94 = vst [vmem:[#allocation8] sm:$0xff] %v93
    // Predicated region
    $region30: #{tpu_custom_call.1} parent=1 // pred_check
      _
    $region31: #{tpu_custom_call.1} parent=1 // pred_check_branch
      %96 = sbr.rel (0) target = $region33
    $region32: #{tpu_custom_call.1} parent=1 // pred_region
      %s98 = ssub.s32 128, 128
      %99 = vsyncadd [#allocation4], %s98
      %s101 = sshll.u32 [#allocation8], 4
      %s102 = int_to_ptr.vmem [resolvable:$true] %s101
      %104 = dma.vmem_to_hbm [thread:$0]  %s102, 128, %s3, [#allocation4]
    $region33: #{tpu_custom_call.1} parent=1 // pred_fallthru
      _
    // Predicated region
    $region34: #{tpu_custom_call.1} parent=1 // pred_check
      _
    $region35: #{tpu_custom_call.1} parent=1 // pred_check_branch
      %106 = sbr.rel (0) target = $region37
    $region36: #{tpu_custom_call.1} parent=1 // pred_region
      %107 = dma.done [#allocation4], 128
    $region37: #{tpu_custom_call.1} parent=1 // pred_fallthru
      _
    %108 = vsyncpa [#allocation3], 1
    %109 = vsyncpa [#allocation6], 1
    %110 = vsyncpa [#allocation4], 1

</llo_original>
